<compile_context>
chip_gen: v7x
topology: tpu7x:2x2x1
jax: 0.10.0
libtpu: 0.0.40
codegen_flags: <defaults>
</compile_context>

<pallas_src>
import functools

import jax
import jax.numpy as jnp
from jax.experimental import pallas as pl
from jax.experimental.pallas import tpu as pltpu


_NEG_BIG = -1e30  # class-axis pad value; exp(_NEG_BIG - max) == 0 in f32


def _round_up(x, m):
    return (x + m - 1) // m * m


def _ek_ce_kernel(vl_ref, nl_ref, vt_ref, nt_ref, vout_ref, nout_ref,
                  *, batch, block_rows):
    """One batch tile: accumulate the sum of per-row NLL for both heads."""
    i = pl.program_id(0)

    @pl.when(i == 0)
    def _init():
        vout_ref[0, 0] = jnp.float32(0.0)
        nout_ref[0, 0] = jnp.float32(0.0)

    row0 = i * block_rows

    def _tile_nll_sum(logits_ref, tgt_ref):
        x = logits_ref[...].astype(jnp.float32)              # (BT, Cp)  VPU cast
        t = tgt_ref[...]                                      # (BT, 1)   int32
        m = jnp.max(x, axis=-1, keepdims=True)                # (BT, 1)   XLU
        shifted = x - m                                       # (BT, Cp)  VPU
        lse = jnp.log(jnp.sum(jnp.exp(shifted), axis=-1, keepdims=True))  # EUP+XLU
        cols = jax.lax.broadcasted_iota(jnp.int32, x.shape, 1)
        # gather shifted[row, t[row]] without materializing logprobs / one-hot
        tgt_shift = jnp.sum(jnp.where(cols == t, shifted, 0.0),
                            axis=-1, keepdims=True)           # (BT, 1)
        nll = lse - tgt_shift                                 # (BT, 1)
        # zero out batch-padding rows
        rows = row0 + jax.lax.broadcasted_iota(jnp.int32, nll.shape, 0)
        nll = jnp.where(rows < batch, nll, 0.0)
        return jnp.sum(nll)

    vout_ref[0, 0] += _tile_nll_sum(vl_ref, vt_ref)
    nout_ref[0, 0] += _tile_nll_sum(nl_ref, nt_ref)

    @pl.when(i == pl.num_programs(0) - 1)
    def _finalize():
        inv_b = jnp.float32(1.0 / batch)
        vout_ref[0, 0] = vout_ref[0, 0] * inv_b
        nout_ref[0, 0] = nout_ref[0, 0] * inv_b


def _pad_head(logits, targets, c_pad, b_pad):
    B, C = logits.shape
    x = logits
    if c_pad > C:
        x = jnp.concatenate(
            [x, jnp.full((B, c_pad - C), _NEG_BIG, dtype=x.dtype)], axis=1)
    if b_pad > B:
        x = jnp.concatenate(
            [x, jnp.zeros((b_pad - B, c_pad), dtype=x.dtype)], axis=0)
    t = targets.astype(jnp.int32).reshape(B, 1)
    if b_pad > B:
        t = jnp.concatenate([t, jnp.zeros((b_pad - B, 1), jnp.int32)], axis=0)
    return x, t


def _pick_block_rows(batch, cv_pad, cn_pad, itemsize):
    # Keep the double-buffered logits inputs of both heads under ~8 MiB so the
    # pipeline also fits comfortably on v7x's smaller VMEM.
    budget = 8 * 1024 * 1024
    per_row = 2 * (cv_pad + cn_pad) * itemsize   # x2 for double buffering
    bt = max(8, min(1024, budget // max(per_row, 1)))
    bt = (bt // 8) * 8
    bt = min(bt, _round_up(batch, 8))
    return int(bt)


def ek_loss_forward(extra_preds, y):
    """EKLoss.forward (default CE, reduction='mean') — one fused Pallas launch."""
    vl, nl = extra_preds["verb"], extra_preds["noun"]
    vt, nt = y["verb"], y["noun"]
    B, Cv = vl.shape
    Bn, Cn = nl.shape
    assert B == Bn, "verb and noun heads must share the batch dimension"

    cv_pad = _round_up(Cv, 128)
    cn_pad = _round_up(Cn, 128)
    itemsize = max(jnp.dtype(vl.dtype).itemsize, jnp.dtype(nl.dtype).itemsize)
    bt = _pick_block_rows(B, cv_pad, cn_pad, itemsize)
    b_pad = _round_up(B, bt)

    vl_p, vt_p = _pad_head(vl, vt, cv_pad, b_pad)
    nl_p, nt_p = _pad_head(nl, nt, cn_pad, b_pad)

    grid = (b_pad // bt,)
    kernel = functools.partial(_ek_ce_kernel, batch=B, block_rows=bt)

    verb_loss, noun_loss = pl.pallas_call(
        kernel,
        out_shape=(
            jax.ShapeDtypeStruct((1, 1), jnp.float32),
            jax.ShapeDtypeStruct((1, 1), jnp.float32),
        ),
        grid=grid,
        in_specs=[
            pl.BlockSpec((bt, cv_pad), lambda i: (i, 0)),
            pl.BlockSpec((bt, cn_pad), lambda i: (i, 0)),
            pl.BlockSpec((bt, 1), lambda i: (i, 0)),
            pl.BlockSpec((bt, 1), lambda i: (i, 0)),
        ],
        out_specs=(
            pl.BlockSpec((1, 1), lambda i: (0, 0),
                         memory_space=pltpu.MemorySpace.SMEM),
            pl.BlockSpec((1, 1), lambda i: (0, 0),
                         memory_space=pltpu.MemorySpace.SMEM),
        ),
        compiler_params=pltpu.CompilerParams(
            dimension_semantics=("arbitrary",),
            vmem_limit_bytes=32 * 1024 * 1024,
        ),
    )(vl_p, nl_p, vt_p, nt_p)

    return {"verb_loss": verb_loss[0, 0], "noun_loss": noun_loss[0, 0]}


def _ce_mean_ref(logits, targets):
    # pure-JAX reference for sanity checking
    lp = jax.nn.log_softmax(logits.astype(jnp.float32), axis=-1)
    nll = -jnp.take_along_axis(lp, targets.astype(jnp.int32)[:, None], axis=-1)[:, 0]
    return jnp.mean(nll)


if __name__ == "__main__":
    key = jax.random.PRNGKey(0)
    k1, k2, k3, k4 = jax.random.split(key, 4)

    B = 8
    C_VERB = 97    # non-multiples of 128 -> exercises lane padding
    C_NOUN = 300

    verb_logits = jax.random.normal(k1, (B, C_VERB), dtype=jnp.float32)
    noun_logits = jax.random.normal(k2, (B, C_NOUN), dtype=jnp.float32)
    verb_targets = jax.random.randint(k3, (B,), 0, C_VERB, dtype=jnp.int32)
    noun_targets = jax.random.randint(k4, (B,), 0, C_NOUN, dtype=jnp.int32)

    extra_preds = {"verb": verb_logits, "noun": noun_logits}
    y = {"verb": verb_targets, "noun": noun_targets}

    out = ek_loss_forward(extra_preds, y)
    out = jax.tree_util.tree_map(jax.block_until_ready, out)

    ref_verb = _ce_mean_ref(verb_logits, verb_targets)
    ref_noun = _ce_mean_ref(noun_logits, noun_targets)
    assert jnp.allclose(out["verb_loss"], ref_verb, atol=1e-5, rtol=1e-5), (
        float(out["verb_loss"]), float(ref_verb))
    assert jnp.allclose(out["noun_loss"], ref_noun, atol=1e-5, rtol=1e-5), (
        float(out["noun_loss"]), float(ref_noun))

    # bf16 logits path (halves HBM bytes on real shapes): looser tolerance
    out_bf16 = ek_loss_forward(
        {"verb": verb_logits.astype(jnp.bfloat16),
         "noun": noun_logits.astype(jnp.bfloat16)}, y)
    out_bf16 = jax.tree_util.tree_map(jax.block_until_ready, out_bf16)
    assert jnp.allclose(out_bf16["verb_loss"], ref_verb, atol=5e-2, rtol=5e-2)
    assert jnp.allclose(out_bf16["noun_loss"], ref_noun, atol=5e-2, rtol=5e-2)

    print("KERNEL_OK")
</pallas_src>

<mosaic_0001>
module attributes {stable_mosaic.version = 11 : i64} {
  func.func @_ek_ce_kernel(%arg0: i32, %arg1: memref<8x128xf32, #tpu.memory_space<vmem>>, %arg2: memref<8x384xf32, #tpu.memory_space<vmem>>, %arg3: memref<8x1xi32, #tpu.memory_space<vmem>>, %arg4: memref<8x1xi32, #tpu.memory_space<vmem>>, %arg5: memref<1x1xf32, #tpu.memory_space<smem>>, %arg6: memref<1x1xf32, #tpu.memory_space<smem>>) attributes {dimension_semantics = [#tpu.dimension_semantics<arbitrary>], iteration_bounds = array<i64: 1>, scalar_prefetch = 0 : i64, scratch_operands = 0 : i64, tpu.core_type = #tpu.core_type<tc>, window_params = [{transform_indices = @transform_0, window_bounds = array<i64: 8, 128>}, {transform_indices = @transform_1, window_bounds = array<i64: 8, 384>}, {transform_indices = @transform_2, window_bounds = array<i64: 8, 1>}, {transform_indices = @transform_3, window_bounds = array<i64: 8, 1>}, {transform_indices = @transform_4, window_bounds = array<i64: 1, 1>}, {transform_indices = @transform_5, window_bounds = array<i64: 1, 1>}]} {
    %c0_i32 = arith.constant 0 : i32
    %0 = arith.cmpi eq, %arg0, %c0_i32 : i32
    %1 = arith.extui %0 : i1 to i32
    %c0_i32_0 = arith.constant 0 : i32
    %2 = arith.cmpi ne, %1, %c0_i32_0 : i32
    scf.if %2 {
      %cst_31 = arith.constant 0.000000e+00 : f32
      %c0_32 = arith.constant 0 : index
      %c0_33 = arith.constant 0 : index
      %71 = memref.load %arg5[%c0_32, %c0_33] : memref<1x1xf32, #tpu.memory_space<smem>>
      memref.store %cst_31, %arg5[%c0_32, %c0_33] : memref<1x1xf32, #tpu.memory_space<smem>>
      %cst_34 = arith.constant 0.000000e+00 : f32
      %c0_35 = arith.constant 0 : index
      %c0_36 = arith.constant 0 : index
      %72 = memref.load %arg6[%c0_35, %c0_36] : memref<1x1xf32, #tpu.memory_space<smem>>
      memref.store %cst_34, %arg6[%c0_35, %c0_36] : memref<1x1xf32, #tpu.memory_space<smem>>
    } else {
    }
    %c8_i32 = arith.constant 8 : i32
    %3 = arith.muli %arg0, %c8_i32 : i32
    %c0 = arith.constant 0 : index
    %c0_1 = arith.constant 0 : index
    %4 = memref.load %arg5[%c0, %c0_1] : memref<1x1xf32, #tpu.memory_space<smem>>
    %c0_2 = arith.constant 0 : index
    %c0_3 = arith.constant 0 : index
    %5 = vector.load %arg1[%c0_2, %c0_3] : memref<8x128xf32, #tpu.memory_space<vmem>>, vector<8x128xf32>
    %c0_4 = arith.constant 0 : index
    %c0_5 = arith.constant 0 : index
    %6 = vector.load %arg3[%c0_4, %c0_5] : memref<8x1xi32, #tpu.memory_space<vmem>>, vector<8x1xi32>
    %cst = arith.constant dense<0xFF800000> : vector<8xf32>
    %7 = vector.multi_reduction <maximumf>, %5, %cst [1] : vector<8x128xf32> to vector<8xf32>
    %8 = vector.shape_cast %7 : vector<8xf32> to vector<8x1xf32>
    %9 = vector.broadcast %8 : vector<8x1xf32> to vector<8x128xf32>
    %10 = arith.subf %5, %9 : vector<8x128xf32>
    %11 = math.exp %10 : vector<8x128xf32>
    %cst_6 = arith.constant dense<0.000000e+00> : vector<8xf32>
    %12 = vector.multi_reduction <add>, %11, %cst_6 [1] : vector<8x128xf32> to vector<8xf32>
    %13 = vector.shape_cast %12 : vector<8xf32> to vector<8x1xf32>
    %14 = math.log %13 : vector<8x1xf32>
    %15 = tpu.iota {dimensions = array<i32: 1>} : vector<8x128xi32>
    %16 = vector.broadcast %6 : vector<8x1xi32> to vector<8x128xi32>
    %17 = arith.cmpi eq, %15, %16 : vector<8x128xi32>
    %cst_7 = arith.constant 0.000000e+00 : f32
    %18 = vector.broadcast %cst_7 : f32 to vector<8x128xf32>
    %19 = arith.select %17, %10, %18 : vector<8x128xi1>, vector<8x128xf32>
    %cst_8 = arith.constant dense<0.000000e+00> : vector<8xf32>
    %20 = vector.multi_reduction <add>, %19, %cst_8 [1] : vector<8x128xf32> to vector<8xf32>
    %21 = vector.shape_cast %20 : vector<8xf32> to vector<8x1xf32>
    %22 = arith.subf %14, %21 : vector<8x1xf32>
    %23 = tpu.iota {dimensions = array<i32: 0>} : vector<8x1xi32>
    %24 = vector.broadcast %3 : i32 to vector<8x1xi32>
    %25 = arith.addi %24, %23 : vector<8x1xi32>
    %c8_i32_9 = arith.constant 8 : i32
    %26 = vector.broadcast %c8_i32_9 : i32 to vector<8x1xi32>
    %27 = arith.cmpi slt, %25, %26 : vector<8x1xi32>
    %cst_10 = arith.constant 0.000000e+00 : f32
    %28 = vector.broadcast %cst_10 : f32 to vector<8x1xf32>
    %29 = arith.select %27, %22, %28 : vector<8x1xi1>, vector<8x1xf32>
    %30 = vector.shape_cast %29 : vector<8x1xf32> to vector<1x8x1xf32>
    %cst_11 = arith.constant dense<0.000000e+00> : vector<1xf32>
    %31 = vector.multi_reduction <add>, %30, %cst_11 [1, 2] : vector<1x8x1xf32> to vector<1xf32>
    %32 = vector.shape_cast %31 : vector<1xf32> to vector<1x1x1xf32>
    %33 = vector.extract %32[0, 0, 0] : f32 from vector<1x1x1xf32>
    %34 = arith.addf %4, %33 : f32
    %c0_12 = arith.constant 0 : index
    %c0_13 = arith.constant 0 : index
    %35 = memref.load %arg5[%c0_12, %c0_13] : memref<1x1xf32, #tpu.memory_space<smem>>
    memref.store %34, %arg5[%c0_12, %c0_13] : memref<1x1xf32, #tpu.memory_space<smem>>
    %c0_14 = arith.constant 0 : index
    %c0_15 = arith.constant 0 : index
    %36 = memref.load %arg6[%c0_14, %c0_15] : memref<1x1xf32, #tpu.memory_space<smem>>
    %c0_16 = arith.constant 0 : index
    %c0_17 = arith.constant 0 : index
    %37 = vector.load %arg2[%c0_16, %c0_17] : memref<8x384xf32, #tpu.memory_space<vmem>>, vector<8x384xf32>
    %c0_18 = arith.constant 0 : index
    %c0_19 = arith.constant 0 : index
    %38 = vector.load %arg4[%c0_18, %c0_19] : memref<8x1xi32, #tpu.memory_space<vmem>>, vector<8x1xi32>
    %cst_20 = arith.constant dense<0xFF800000> : vector<8xf32>
    %39 = vector.multi_reduction <maximumf>, %37, %cst_20 [1] : vector<8x384xf32> to vector<8xf32>
    %40 = vector.shape_cast %39 : vector<8xf32> to vector<8x1xf32>
    %41 = vector.broadcast %40 : vector<8x1xf32> to vector<8x384xf32>
    %42 = arith.subf %37, %41 : vector<8x384xf32>
    %43 = math.exp %42 : vector<8x384xf32>
    %cst_21 = arith.constant dense<0.000000e+00> : vector<8xf32>
    %44 = vector.multi_reduction <add>, %43, %cst_21 [1] : vector<8x384xf32> to vector<8xf32>
    %45 = vector.shape_cast %44 : vector<8xf32> to vector<8x1xf32>
    %46 = math.log %45 : vector<8x1xf32>
    %47 = tpu.iota {dimensions = array<i32: 1>} : vector<8x384xi32>
    %48 = vector.broadcast %38 : vector<8x1xi32> to vector<8x384xi32>
    %49 = arith.cmpi eq, %47, %48 : vector<8x384xi32>
    %cst_22 = arith.constant 0.000000e+00 : f32
    %50 = vector.broadcast %cst_22 : f32 to vector<8x384xf32>
    %51 = arith.select %49, %42, %50 : vector<8x384xi1>, vector<8x384xf32>
    %cst_23 = arith.constant dense<0.000000e+00> : vector<8xf32>
    %52 = vector.multi_reduction <add>, %51, %cst_23 [1] : vector<8x384xf32> to vector<8xf32>
    %53 = vector.shape_cast %52 : vector<8xf32> to vector<8x1xf32>
    %54 = arith.subf %46, %53 : vector<8x1xf32>
    %55 = tpu.iota {dimensions = array<i32: 0>} : vector<8x1xi32>
    %56 = vector.broadcast %3 : i32 to vector<8x1xi32>
    %57 = arith.addi %56, %55 : vector<8x1xi32>
    %c8_i32_24 = arith.constant 8 : i32
    %58 = vector.broadcast %c8_i32_24 : i32 to vector<8x1xi32>
    %59 = arith.cmpi slt, %57, %58 : vector<8x1xi32>
    %cst_25 = arith.constant 0.000000e+00 : f32
    %60 = vector.broadcast %cst_25 : f32 to vector<8x1xf32>
    %61 = arith.select %59, %54, %60 : vector<8x1xi1>, vector<8x1xf32>
    %62 = vector.shape_cast %61 : vector<8x1xf32> to vector<1x8x1xf32>
    %cst_26 = arith.constant dense<0.000000e+00> : vector<1xf32>
    %63 = vector.multi_reduction <add>, %62, %cst_26 [1, 2] : vector<1x8x1xf32> to vector<1xf32>
    %64 = vector.shape_cast %63 : vector<1xf32> to vector<1x1x1xf32>
    %65 = vector.extract %64[0, 0, 0] : f32 from vector<1x1x1xf32>
    %66 = arith.addf %36, %65 : f32
    %c0_27 = arith.constant 0 : index
    %c0_28 = arith.constant 0 : index
    %67 = memref.load %arg6[%c0_27, %c0_28] : memref<1x1xf32, #tpu.memory_space<smem>>
    memref.store %66, %arg6[%c0_27, %c0_28] : memref<1x1xf32, #tpu.memory_space<smem>>
    %c0_i32_29 = arith.constant 0 : i32
    %68 = arith.cmpi eq, %arg0, %c0_i32_29 : i32
    %69 = arith.extui %68 : i1 to i32
    %c0_i32_30 = arith.constant 0 : i32
    %70 = arith.cmpi ne, %69, %c0_i32_30 : i32
    scf.if %70 {
      %c0_31 = arith.constant 0 : index
      %c0_32 = arith.constant 0 : index
      %71 = memref.load %arg5[%c0_31, %c0_32] : memref<1x1xf32, #tpu.memory_space<smem>>
      %cst_33 = arith.constant 1.250000e-01 : f32
      %72 = arith.mulf %71, %cst_33 : f32
      %c0_34 = arith.constant 0 : index
      %c0_35 = arith.constant 0 : index
      %73 = memref.load %arg5[%c0_34, %c0_35] : memref<1x1xf32, #tpu.memory_space<smem>>
      memref.store %72, %arg5[%c0_34, %c0_35] : memref<1x1xf32, #tpu.memory_space<smem>>
      %c0_36 = arith.constant 0 : index
      %c0_37 = arith.constant 0 : index
      %74 = memref.load %arg6[%c0_36, %c0_37] : memref<1x1xf32, #tpu.memory_space<smem>>
      %cst_38 = arith.constant 1.250000e-01 : f32
      %75 = arith.mulf %74, %cst_38 : f32
      %c0_39 = arith.constant 0 : index
      %c0_40 = arith.constant 0 : index
      %76 = memref.load %arg6[%c0_39, %c0_40] : memref<1x1xf32, #tpu.memory_space<smem>>
      memref.store %75, %arg6[%c0_39, %c0_40] : memref<1x1xf32, #tpu.memory_space<smem>>
    } else {
    }
    return
  }
  func.func @transform_0(%arg0: i32) -> (i32, i32) {
    %c0_i32 = arith.constant 0 : i32
    %c0_i32_0 = arith.constant 0 : i32
    return %arg0, %c0_i32 : i32, i32
  }
  func.func @transform_1(%arg0: i32) -> (i32, i32) {
    %c0_i32 = arith.constant 0 : i32
    %c0_i32_0 = arith.constant 0 : i32
    return %arg0, %c0_i32 : i32, i32
  }
  func.func @transform_2(%arg0: i32) -> (i32, i32) {
    %c0_i32 = arith.constant 0 : i32
    %c0_i32_0 = arith.constant 0 : i32
    return %arg0, %c0_i32 : i32, i32
  }
  func.func @transform_3(%arg0: i32) -> (i32, i32) {
    %c0_i32 = arith.constant 0 : i32
    %c0_i32_0 = arith.constant 0 : i32
    return %arg0, %c0_i32 : i32, i32
  }
  func.func @transform_4(%arg0: i32) -> (i32, i32) {
    %c0_i32 = arith.constant 0 : i32
    %c0_i32_0 = arith.constant 0 : i32
    %c0_i32_1 = arith.constant 0 : i32
    return %c0_i32, %c0_i32_0 : i32, i32
  }
  func.func @transform_5(%arg0: i32) -> (i32, i32) {
    %c0_i32 = arith.constant 0 : i32
    %c0_i32_0 = arith.constant 0 : i32
    %c0_i32_1 = arith.constant 0 : i32
    return %c0_i32, %c0_i32_0 : i32, i32
  }
}

</mosaic_0001>

<llo_original>
// kernel: tpu_custom_call.1
$region0: #{tpu_custom_call.1}
  #allocation0 [shape = 'u32[]', space=smem, size = 0x4, offset = 0x4, fixed_abs, tag = 'smem constant byte address 0x4 - core index']
  #allocation1 [shape = 'u32[144,128]{1,0:T(1,128)}', space=vmem, size = 0x12000, scoped, tag = 'internal scratch']
  %s0 = inlined_call_operand.vmem [shape: f32[8,128], index: 0, kind: input, shape index: {}]
  %s1 = inlined_call_operand.hbm [shape: f32[8,384], index: 1, kind: input, shape index: {}]
  %s2 = inlined_call_operand.vmem [shape: s32[8,1], index: 2, kind: input, shape index: {}]
  %s3 = inlined_call_operand.vmem [shape: s32[8,1], index: 3, kind: input, shape index: {}]
  %s4 = inlined_call_operand.hbm [shape: f32[1,1], index: 4, kind: output, shape index: {0}]
  %s5 = inlined_call_operand.hbm [shape: f32[1,1], index: 5, kind: output, shape index: {1}]
  %6 = xla_tuple %s4, %s5
  %s7 = sld [smem:[#allocation0]]
  $region46: #{tpu_custom_call.1} parent=0
    _
  %s9 = ssub.s32 1, %s7
  %s10 = scalar_select 0, %s9, %s7
  $region1: #{tpu_custom_call.1} parent=0
    #allocation2 [shape = 'u8[12288]{0}', space=vmem, size = 0x3000, scoped, tag = 'input window, operand 1, single buffered']
    #allocation3 [shape = 's32[1]{0}', space=sflag, size = 0x4, scoped, tag = 'scoped memory for tpu_custom_call.1']
    #allocation4 [shape = 's32[1]{0}', space=sflag, size = 0x4, scoped, tag = 'scoped memory for tpu_custom_call.1']
    #allocation5 [shape = 'u8[512]{0}', space=smem, size = 0x200, scoped, tag = 'output window, operand 0, single buffered']
    #allocation6 [shape = 'u8[512]{0}', space=smem, size = 0x200, scoped, tag = 'output window, operand 1, single buffered']
    #allocation7 [shape = 's32[1]{0}', space=sflag, size = 0x4, scoped, tag = 'scoped memory for tpu_custom_call.1']
    %11 = vsyncpa [#allocation3], 0
    %12 = vsyncpa [#allocation4], 0
    %13 = vsyncpa [#allocation7], 0
    // Predicated region
    $region2: #{tpu_custom_call.1} parent=1 // pred_check
      _
    $region3: #{tpu_custom_call.1} parent=1 // pred_check_branch
      %15 = sbr.rel (0) target = $region5
    $region4: #{tpu_custom_call.1} parent=1 // pred_region
      _
    $region5: #{tpu_custom_call.1} parent=1 // pred_fallthru
      _
    // Predicated region
    $region6: #{tpu_custom_call.1} parent=1 // pred_check
      _
    $region7: #{tpu_custom_call.1} parent=1 // pred_check_branch
      %17 = sbr.rel (0) target = $region9
    $region8: #{tpu_custom_call.1} parent=1 // pred_region
      %s19 = ssub.s32 384, 384
      %20 = vsyncadd [#allocation3], %s19
      %s22 = sshll.u32 [#allocation2], 4
      %s23 = int_to_ptr.vmem [resolvable:$true] %s22
      %25 = dma.hbm_to_vmem [thread:$0]  %s1, 384, %s23, [#allocation3]
    $region9: #{tpu_custom_call.1} parent=1 // pred_fallthru
      _
    // Predicated region
    $region10: #{tpu_custom_call.1} parent=1 // pred_check
      _
    $region11: #{tpu_custom_call.1} parent=1 // pred_check_branch
      %27 = sbr.rel (0) target = $region13
    $region12: #{tpu_custom_call.1} parent=1 // pred_region
      _
    $region13: #{tpu_custom_call.1} parent=1 // pred_fallthru
      _
    // Predicated region
    $region14: #{tpu_custom_call.1} parent=1 // pred_check
      _
    $region15: #{tpu_custom_call.1} parent=1 // pred_check_branch
      %29 = sbr.rel (0) target = $region17
    $region16: #{tpu_custom_call.1} parent=1 // pred_region
      _
    $region17: #{tpu_custom_call.1} parent=1 // pred_fallthru
      _
    // Predicated region
    $region18: #{tpu_custom_call.1} parent=1 // pred_check
      _
    $region19: #{tpu_custom_call.1} parent=1 // pred_check_branch
      %31 = sbr.rel (0) target = $region21
    $region20: #{tpu_custom_call.1} parent=1 // pred_region
      %32 = dma.done [#allocation3], 384
    $region21: #{tpu_custom_call.1} parent=1 // pred_fallthru
      _
    %p33 = scmp.eq.s32.totalorder 0, 0
    // Predicated region
    $region22: #{tpu_custom_call.1} parent=1 // pred_check
      %p34 = pneg %p33
    $region23: #{tpu_custom_call.1} parent=1 // pred_check_branch
      %36 = sbr.rel (%p34) target = $region25
    $region24: #{tpu_custom_call.1} parent=1 // pred_region
      %s37 = scalar_lea.smem [#allocation5], 0
      %38 = sst [smem:[%s37]] 0.0
      %s39 = scalar_lea.smem [#allocation6], 0
      %40 = sst [smem:[%s39]] 0.0
    $region25: #{tpu_custom_call.1} parent=1 // pred_fallthru
      _
    %s41 = smul.u32 0, 8
    %s42 = sld [smem:[#allocation5]]
    %v43 = vld [vmem:[%s0] sm:$0xff]
    %v44 = vld [vmem:[%s2] sm:$0xff]
    %45 = vmax.xlane.f32.xlu0 %v43
    %v46 = vpop.xlane.xlu0 %45
    %v47 = vsub.f32 %v43, %v46
    %v48 = vmul.f32 %v47, 1.442695
    %v49 = vpow.pop %v48
    %50 = vadd.xlane.f32.xlu0 %v49
    %v51 = vpop.xlane.xlu0 %50
    %v52 = vlog2.pop %v51
    %v53 = vmul.f32 %v52, 0.6931472
    %v54 = vlaneseq
    %v55 = vand.u32 %v54, 127
    %56 = vset.pattern.permute.xlu0 0
    %57 = vperm.xlu0 %56, %v44
    %v58 = vpop.permute.xlu0 %57
    %vm59 = vcmp.eq.s32.totalorder %v55, %v58
    %v60 = vsel %vm59, %v47, 0.0
    %61 = vadd.xlane.f32.xlu0 %v60
    %v62 = vpop.xlane.xlu0 %61
    %v63 = vsub.f32 %v53, %v62
    %v64 = vlaneseq
    %v65 = vshrl.u32 %v64, 7
    %v66 = vstv %s41
    %v67 = vadd.s32 %v66, %v65
    %vm68 = vcmp.lt.s32.totalorder %v67, 8
    %v69 = vsel %vm68, %v63, 0.0
    %vm70 = vcmask 7168
    %v71 = vsel %vm70, %v69, 0.0
    %72 = vadd.xlane.f32.xlu0 %v71
    %v73 = vpop.xlane.xlu0 %72
    %v74 = vrot.slane %v73, 4
    %v75 = vadd.f32 %v73, %v74
    %v76 = vrot.slane %v75, 2
    %v77 = vadd.f32 %v75, %v76
    %v78 = vrot.slane %v77, 1
    %v79 = vadd.f32 %v77, %v78
    %s80 = vtos %v79
    %s81 = sadd.f32 %s42, %s80
    %s82 = scalar_lea.smem [#allocation5], 0
    %83 = sst [smem:[%s82]] %s81
    %s84 = sld [smem:[#allocation6]]
    %v85 = vld [vmem:[#allocation2] sm:$0xff]
    %v86 = vld [vmem:[#allocation2 + $0x8] sm:$0xff]
    %v87 = vld [vmem:[#allocation2 + $0x10] sm:$0xff]
    %v88 = vld [vmem:[%s3] sm:$0xff]
    %v89 = vmax.f32 %v85, %v86
    %v90 = vmax.f32 %v89, %v87
    %91 = vmax.xlane.f32.xlu0 %v90
    %v92 = vpop.xlane.xlu0 %91
    %v93 = vsub.f32 %v85, %v92
    %v94 = vsub.f32 %v86, %v92
    %v95 = vsub.f32 %v87, %v92
    %v96 = vmul.f32 %v93, 1.442695
    %v97 = vpow.pop %v96
    %v98 = vmul.f32 %v94, 1.442695
    %v99 = vpow.pop %v98
    %v100 = vmul.f32 %v95, 1.442695
    %v101 = vpow.pop %v100
    %v102 = vadd.f32 %v97, %v99
    %v103 = vadd.f32 %v102, %v101
    %104 = vadd.xlane.f32.xlu0 %v103
    %v105 = vpop.xlane.xlu0 %104
    %v106 = vlog2.pop %v105
    %v107 = vmul.f32 %v106, 0.6931472
    %v108 = vadd.s32 %v55, 128
    %v109 = vadd.s32 %v55, 256
    %110 = vset.pattern.permute.xlu0 0
    %111 = vperm.xlu0 %110, %v88
    %v112 = vpop.permute.xlu0 %111
    %vm113 = vcmp.eq.s32.totalorder %v55, %v112
    %vm114 = vcmp.eq.s32.totalorder %v108, %v112
    %vm115 = vcmp.eq.s32.totalorder %v109, %v112
    %v116 = vsel %vm113, %v93, 0.0
    %v117 = vsel %vm114, %v94, 0.0
    %v118 = vsel %vm115, %v95, 0.0
    %v119 = vadd.f32 %v116, %v117
    %v120 = vadd.f32 %v119, %v118
    %121 = vadd.xlane.f32.xlu0 %v120
    %v122 = vpop.xlane.xlu0 %121
    %v123 = vsub.f32 %v107, %v122
    %v124 = vsel %vm68, %v123, 0.0
    %v125 = vsel %vm70, %v124, 0.0
    %126 = vadd.xlane.f32.xlu0 %v125
    %v127 = vpop.xlane.xlu0 %126
    %v128 = vrot.slane %v127, 4
    %v129 = vadd.f32 %v127, %v128
    %v130 = vrot.slane %v129, 2
    %v131 = vadd.f32 %v129, %v130
    %v132 = vrot.slane %v131, 1
    %v133 = vadd.f32 %v131, %v132
    %s134 = vtos %v133
    %s135 = sadd.f32 %s84, %s134
    %s136 = scalar_lea.smem [#allocation6], 0
    %137 = sst [smem:[%s136]] %s135
    // Predicated region
    $region26: #{tpu_custom_call.1} parent=1 // pred_check
      %p138 = pneg %p33
    $region27: #{tpu_custom_call.1} parent=1 // pred_check_branch
      %140 = sbr.rel (%p138) target = $region29
    $region28: #{tpu_custom_call.1} parent=1 // pred_region
      %s141 = sld [smem:[#allocation5]]
      %s142 = smul.f32 %s141, 0.125
      %143 = sst [smem:[%s82]] %s142
      %s144 = sld [smem:[#allocation6]]
      %s145 = smul.f32 %s144, 0.125
      %146 = sst [smem:[%s136]] %s145
    $region29: #{tpu_custom_call.1} parent=1 // pred_fallthru
      _
    // Predicated region
    $region30: #{tpu_custom_call.1} parent=1 // pred_check
      _
    $region31: #{tpu_custom_call.1} parent=1 // pred_check_branch
      %148 = sbr.rel (0) target = $region33
    $region32: #{tpu_custom_call.1} parent=1 // pred_region
      %s150 = ssub.s32 16, 16
      %151 = vsyncadd [#allocation4], %s150
      %154 = dma.smem_to_hbm [#allocation5], 16, %s4, [#allocation4]
    $region33: #{tpu_custom_call.1} parent=1 // pred_fallthru
      _
    // Predicated region
    $region34: #{tpu_custom_call.1} parent=1 // pred_check
      _
    $region35: #{tpu_custom_call.1} parent=1 // pred_check_branch
      %156 = sbr.rel (0) target = $region37
    $region36: #{tpu_custom_call.1} parent=1 // pred_region
      %s158 = ssub.s32 16, 16
      %159 = vsyncadd [#allocation7], %s158
      %162 = dma.smem_to_hbm [#allocation6], 16, %s5, [#allocation7]
    $region37: #{tpu_custom_call.1} parent=1 // pred_fallthru
      _
    // Predicated region
    $region38: #{tpu_custom_call.1} parent=1 // pred_check
      _
    $region39: #{tpu_custom_call.1} parent=1 // pred_check_branch
      %164 = sbr.rel (0) target = $region41
    $region40: #{tpu_custom_call.1} parent=1 // pred_region
      %165 = dma.done [#allocation4], 16
    $region41: #{tpu_custom_call.1} parent=1 // pred_fallthru
      _
    // Predicated region
    $region42: #{tpu_custom_call.1} parent=1 // pred_check
      _
    $region43: #{tpu_custom_call.1} parent=1 // pred_check_branch
      %167 = sbr.rel (0) target = $region45
    $region44: #{tpu_custom_call.1} parent=1 // pred_region
      %168 = dma.done [#allocation7], 16
    $region45: #{tpu_custom_call.1} parent=1 // pred_fallthru
      _
    %169 = sfence
    %170 = vsyncpa [#allocation3], 1
    %171 = vsyncpa [#allocation4], 1
    %172 = vsyncpa [#allocation7], 1

</llo_original>
